<compile_context>
chip_gen: v7x
topology: tpu7x:2x2x1
jax: 0.10.0
libtpu: 0.0.40
codegen_flags: <defaults>
</compile_context>

<pallas_src>
import jax
import jax.numpy as jnp
from jax.experimental import pallas as pl
from jax.experimental.pallas import tpu as pltpu

MULTIPLIER = 0.25


def _mask_predictor_kernel(p_ref, w1_ref, b1_ref, w2_ref, b2_ref, out_ref):
    # p_ref  : (TM, 9*Cin)     bf16 im2col patches (rows = pixels, lane-dense K)
    # w1_ref : (9*Cin, hidden) bf16 3x3 conv weights, im2col-flattened
    # b1_ref : (1, hidden)     f32
    # w2_ref : (hidden, Cout)  bf16 1x1 conv weights, multiplier pre-folded
    # b2_ref : (1, Cout)       f32, multiplier pre-folded
    # out_ref: (TM, Cout)      f32
    h = jnp.dot(p_ref[...], w1_ref[...], preferred_element_type=jnp.float32)
    h = jnp.maximum(h + b1_ref[...], 0.0)
    out = jnp.dot(h.astype(w2_ref.dtype), w2_ref[...],
                  preferred_element_type=jnp.float32)
    out_ref[...] = (out + b2_ref[...]).astype(out_ref.dtype)


def _round_up(x, m):
    return ((x + m - 1) // m) * m


def _choose_tile_m(M, tile_m):
    tm = max(8, min(_round_up(tile_m, 8), _round_up(M, 8)))
    # Keep >= 4 grid steps where possible so the "parallel" M axis load-balances
    # across v7x's 2 TensorCores (irrelevant but harmless on v5e/v6e).
    if M >= 32 and pl.cdiv(M, tm) < 4:
        tm = max(8, (max(M // 4, 8) // 8) * 8)
    return tm


def _im2col_and_weights(x_nchw, w1_oihw, b1, w2_oihw, b2, multiplier, mm_dtype):
    """Shared prep for the Pallas path and the matching-precision reference."""
    N, Cin, H, W = x_nchw.shape
    hidden = w1_oihw.shape[0]
    Cout = w2_oihw.shape[0]
    K = 9 * Cin
    M = N * H * W

    # im2col in the wrapper (XLA): one lane-dense (M, 9*Cin) patch matrix.
    x_nhwc = jnp.transpose(x_nchw, (0, 2, 3, 1))
    x_pad = jnp.pad(x_nhwc, ((0, 0), (1, 1), (1, 1), (0, 0)))
    taps = [x_pad[:, ki:ki + H, kj:kj + W, :]
            for ki in range(3) for kj in range(3)]
    patches = jnp.concatenate(taps, axis=-1).reshape(M, K).astype(mm_dtype)

    # Weights: OIHW -> (9*Cin, hidden); fold multiplier into the 1x1 conv.
    # Tap ordering (ki major, kj, then Cin) matches the (kh, kw, Cin, O) reshape.
    w1 = jnp.transpose(w1_oihw, (2, 3, 1, 0)).reshape(K, hidden).astype(mm_dtype)
    w2 = (multiplier * jnp.transpose(w2_oihw[:, :, 0, 0], (1, 0))).astype(mm_dtype)
    b1_2d = b1.reshape(1, hidden).astype(jnp.float32)
    b2_2d = (multiplier * b2).reshape(1, Cout).astype(jnp.float32)
    return patches, w1, b1_2d, w2, b2_2d, (N, H, W, Cout, M, K, hidden)


def mask_predictor_pallas(x_nchw, w1_oihw, b1, w2_oihw, b2, *,
                          multiplier=MULTIPLIER, tile_m=512,
                          mm_dtype=jnp.bfloat16):
    """x_nchw: (N, Cin, H, W) f32.  Returns (N, 576, H, W) f32 (PyTorch layout)."""
    patches, w1, b1_2d, w2, b2_2d, meta = _im2col_and_weights(
        x_nchw, w1_oihw, b1, w2_oihw, b2, multiplier, mm_dtype)
    N, H, W, Cout, M, K, hidden = meta

    tm = _choose_tile_m(M, tile_m)
    grid = (pl.cdiv(M, tm),)

    # Note: weight/bias blocks have constant index maps so Mosaic fetches them
    # once; pipeline_mode=pl.Buffered(1) would save ~1 MB of VMEM but is
    # skipped here in favor of guaranteed-clean lowering (VMEM use is well
    # under budget with bf16 patches at tile_m<=1024).
    out_flat = pl.pallas_call(
        _mask_predictor_kernel,
        out_shape=jax.ShapeDtypeStruct((M, Cout), jnp.float32),
        grid_spec=pltpu.PrefetchScalarGridSpec(
            num_scalar_prefetch=0,
            grid=grid,
            in_specs=[
                pl.BlockSpec((tm, K), lambda i: (i, 0)),
                pl.BlockSpec((K, hidden), lambda i: (0, 0)),
                pl.BlockSpec((1, hidden), lambda i: (0, 0)),
                pl.BlockSpec((hidden, Cout), lambda i: (0, 0)),
                pl.BlockSpec((1, Cout), lambda i: (0, 0)),
            ],
            out_specs=pl.BlockSpec((tm, Cout), lambda i: (i, 0)),
        ),
        compiler_params=pltpu.CompilerParams(
            dimension_semantics=("parallel",),
            vmem_limit_bytes=48 * 1024 * 1024,
        ),
    )(patches, w1, b1_2d, w2, b2_2d)

    out_nhwc = out_flat.reshape(N, H, W, Cout)
    # NHWC -> NCHW only to match the PyTorch module's output convention.
    # Consumers that accept NHWC / flat (M, 576) should skip this transpose
    # (saves a full read+write of the 576-channel output in HBM).
    return jnp.transpose(out_nhwc, (0, 3, 1, 2))


def _reference_matmul_bf16(x_nchw, w1_oihw, b1, w2_oihw, b2,
                           multiplier=MULTIPLIER):
    """Pure-JAX reference following the same bf16 matmul path as the kernel."""
    patches, w1, b1_2d, w2, b2_2d, meta = _im2col_and_weights(
        x_nchw, w1_oihw, b1, w2_oihw, b2, multiplier, jnp.bfloat16)
    N, H, W, Cout, M, K, hidden = meta
    h = jnp.dot(patches, w1, preferred_element_type=jnp.float32)
    h = jnp.maximum(h + b1_2d, 0.0)
    o = jnp.dot(h.astype(jnp.bfloat16), w2,
                preferred_element_type=jnp.float32) + b2_2d
    return jnp.transpose(o.reshape(N, H, W, Cout), (0, 3, 1, 2))


def _reference_conv_f32(x_nchw, w1_oihw, b1, w2_oihw, b2,
                        multiplier=MULTIPLIER):
    """Full-precision lax-conv reference (module semantics)."""
    prec = jax.lax.Precision.HIGHEST
    dn = jax.lax.conv_dimension_numbers(x_nchw.shape, w1_oihw.shape,
                                        ("NCHW", "OIHW", "NCHW"))
    h = jax.lax.conv_general_dilated(x_nchw, w1_oihw, (1, 1), "SAME",
                                     dimension_numbers=dn, precision=prec)
    h = jnp.maximum(h + b1[None, :, None, None], 0.0)
    dn2 = jax.lax.conv_dimension_numbers(h.shape, w2_oihw.shape,
                                         ("NCHW", "OIHW", "NCHW"))
    o = jax.lax.conv_general_dilated(h, w2_oihw, (1, 1), "VALID",
                                     dimension_numbers=dn2, precision=prec)
    return multiplier * (o + b2[None, :, None, None])


if __name__ == "__main__":
    # Small shapes consistent with the module's forward.
    N, Cin, H, W = 2, 4, 16, 16
    HIDDEN = 32
    COUT = 8 * 8 * 9  # 576

    key = jax.random.PRNGKey(0)
    k_x, k_w1, k_b1, k_w2, k_b2 = jax.random.split(key, 5)

    x = jax.random.normal(k_x, (N, Cin, H, W), jnp.float32)
    w1 = jax.random.normal(k_w1, (HIDDEN, Cin, 3, 3), jnp.float32) * 0.1
    b1 = jax.random.normal(k_b1, (HIDDEN,), jnp.float32) * 0.1
    w2 = jax.random.normal(k_w2, (COUT, HIDDEN, 1, 1), jnp.float32) * 0.1
    b2 = jax.random.normal(k_b2, (COUT,), jnp.float32) * 0.1

    out = jax.block_until_ready(mask_predictor_pallas(x, w1, b1, w2, b2))
    assert out.shape == (N, COUT, H, W), out.shape

    # Tight check against a reference that follows the identical bf16 path.
    ref_bf16 = jax.block_until_ready(_reference_matmul_bf16(x, w1, b1, w2, b2))
    assert jnp.allclose(out, ref_bf16, atol=2e-3, rtol=2e-3), \
        float(jnp.max(jnp.abs(out - ref_bf16)))

    # Loose sanity check against the full-precision conv reference.
    ref_f32 = jax.block_until_ready(_reference_conv_f32(x, w1, b1, w2, b2))
    assert jnp.allclose(out, ref_f32, atol=5e-2, rtol=5e-2), \
        float(jnp.max(jnp.abs(out - ref_f32)))

    print("KERNEL_OK")
</pallas_src>

<mosaic_0001>
module attributes {stable_mosaic.version = 11 : i64} {
  func.func @_mask_predictor_kernel(%arg0: i32, %arg1: memref<128x36xbf16, #tpu.memory_space<vmem>>, %arg2: memref<36x32xbf16, #tpu.memory_space<vmem>>, %arg3: memref<1x32xf32, #tpu.memory_space<vmem>>, %arg4: memref<32x576xbf16, #tpu.memory_space<vmem>>, %arg5: memref<1x576xf32, #tpu.memory_space<vmem>>, %arg6: memref<128x576xf32, #tpu.memory_space<vmem>>) attributes {dimension_semantics = [#tpu.dimension_semantics<parallel>], iteration_bounds = array<i64: 4>, scalar_prefetch = 0 : i64, scratch_operands = 0 : i64, tpu.core_type = #tpu.core_type<tc>, window_params = [{transform_indices = @transform_0, window_bounds = array<i64: 128, 36>}, {pipeline_mode = #tpu.pipeline_mode<synchronous>, transform_indices = @transform_1, window_bounds = array<i64: 36, 32>}, {pipeline_mode = #tpu.pipeline_mode<synchronous>, transform_indices = @transform_2, window_bounds = array<i64: 1, 32>}, {pipeline_mode = #tpu.pipeline_mode<synchronous>, transform_indices = @transform_3, window_bounds = array<i64: 32, 576>}, {pipeline_mode = #tpu.pipeline_mode<synchronous>, transform_indices = @transform_4, window_bounds = array<i64: 1, 576>}, {transform_indices = @transform_5, window_bounds = array<i64: 128, 576>}]} {
    %c0 = arith.constant 0 : index
    %c0_0 = arith.constant 0 : index
    %0 = vector.load %arg1[%c0, %c0_0] : memref<128x36xbf16, #tpu.memory_space<vmem>>, vector<128x36xbf16>
    %c0_1 = arith.constant 0 : index
    %c0_2 = arith.constant 0 : index
    %1 = vector.load %arg2[%c0_1, %c0_2] : memref<36x32xbf16, #tpu.memory_space<vmem>>, vector<36x32xbf16>
    %cst = arith.constant dense<0.000000e+00> : vector<128x32xf32>
    %2 = tpu.matmul %0, %1, %cst {dimension_numbers = #tpu.dot_dimension_numbers<[1], [0], [0], [1], [0, 0, 1, 1], [], []>} : vector<128x36xbf16>, vector<36x32xbf16>, vector<128x32xf32> -> vector<128x32xf32>
    %c0_3 = arith.constant 0 : index
    %c0_4 = arith.constant 0 : index
    %3 = vector.load %arg3[%c0_3, %c0_4] : memref<1x32xf32, #tpu.memory_space<vmem>>, vector<1x32xf32>
    %4 = vector.broadcast %3 : vector<1x32xf32> to vector<128x32xf32>
    %5 = arith.addf %2, %4 : vector<128x32xf32>
    %cst_5 = arith.constant 0.000000e+00 : f32
    %6 = vector.broadcast %cst_5 : f32 to vector<128x32xf32>
    %7 = arith.maximumf %5, %6 : vector<128x32xf32>
    %8 = arith.truncf %7 : vector<128x32xf32> to vector<128x32xbf16>
    %c0_6 = arith.constant 0 : index
    %c0_7 = arith.constant 0 : index
    %9 = vector.load %arg4[%c0_6, %c0_7] : memref<32x576xbf16, #tpu.memory_space<vmem>>, vector<32x576xbf16>
    %cst_8 = arith.constant dense<0.000000e+00> : vector<128x576xf32>
    %10 = tpu.matmul %8, %9, %cst_8 {dimension_numbers = #tpu.dot_dimension_numbers<[1], [0], [0], [1], [0, 0, 1, 1], [], []>} : vector<128x32xbf16>, vector<32x576xbf16>, vector<128x576xf32> -> vector<128x576xf32>
    %c0_9 = arith.constant 0 : index
    %c0_10 = arith.constant 0 : index
    %11 = vector.load %arg5[%c0_9, %c0_10] : memref<1x576xf32, #tpu.memory_space<vmem>>, vector<1x576xf32>
    %12 = vector.broadcast %11 : vector<1x576xf32> to vector<128x576xf32>
    %13 = arith.addf %10, %12 : vector<128x576xf32>
    %c0_11 = arith.constant 0 : index
    %c0_12 = arith.constant 0 : index
    %14 = vector.load %arg6[%c0_11, %c0_12] : memref<128x576xf32, #tpu.memory_space<vmem>>, vector<128x576xf32>
    tpu.vector_store %arg6[%c0_11, %c0_12], %13 {strides = array<i32>} : memref<128x576xf32, #tpu.memory_space<vmem>>, vector<128x576xf32>,
    return
  }
  func.func @transform_0(%arg0: i32) -> (i32, i32) {
    %c0_i32 = arith.constant 0 : i32
    %c0_i32_0 = arith.constant 0 : i32
    return %arg0, %c0_i32 : i32, i32
  }
  func.func @transform_1(%arg0: i32) -> (i32, i32) {
    %c0_i32 = arith.constant 0 : i32
    %c0_i32_0 = arith.constant 0 : i32
    %c0_i32_1 = arith.constant 0 : i32
    return %c0_i32, %c0_i32_0 : i32, i32
  }
  func.func @transform_2(%arg0: i32) -> (i32, i32) {
    %c0_i32 = arith.constant 0 : i32
    %c0_i32_0 = arith.constant 0 : i32
    %c0_i32_1 = arith.constant 0 : i32
    return %c0_i32, %c0_i32_0 : i32, i32
  }
  func.func @transform_3(%arg0: i32) -> (i32, i32) {
    %c0_i32 = arith.constant 0 : i32
    %c0_i32_0 = arith.constant 0 : i32
    %c0_i32_1 = arith.constant 0 : i32
    return %c0_i32, %c0_i32_0 : i32, i32
  }
  func.func @transform_4(%arg0: i32) -> (i32, i32) {
    %c0_i32 = arith.constant 0 : i32
    %c0_i32_0 = arith.constant 0 : i32
    %c0_i32_1 = arith.constant 0 : i32
    return %c0_i32, %c0_i32_0 : i32, i32
  }
  func.func @transform_5(%arg0: i32) -> (i32, i32) {
    %c0_i32 = arith.constant 0 : i32
    %c0_i32_0 = arith.constant 0 : i32
    return %arg0, %c0_i32 : i32, i32
  }
}

</mosaic_0001>

<llo_original>
// kernel: tpu_custom_call.1
$region0: #{tpu_custom_call.1}
  #allocation0 [shape = 'u32[]', space=smem, size = 0x4, offset = 0x4, fixed_abs, tag = 'smem constant byte address 0x4 - core index']
  #allocation1 [shape = 'u32[144,128]{1,0:T(1,128)}', space=vmem, size = 0x12000, scoped, tag = 'internal scratch']
  %s0 = inlined_call_operand.vmem [shape: bf16[512,36], index: 0, kind: input, shape index: {}]
  %s1 = inlined_call_operand.vmem [shape: bf16[36,32], index: 1, kind: input, shape index: {}]
  %s2 = inlined_call_operand.hbm [shape: f32[1,32], index: 2, kind: input, shape index: {}]
  %s3 = inlined_call_operand.hbm [shape: bf16[32,576], index: 3, kind: input, shape index: {}]
  %s4 = inlined_call_operand.hbm [shape: f32[1,576], index: 4, kind: input, shape index: {}]
  %s5 = inlined_call_operand.vmem [shape: f32[512,576], index: 5, kind: output, shape index: {}]
  %s6 = sld [smem:[#allocation0]]
  $region65: #{tpu_custom_call.1} parent=0
    _
  %s8 = ssub.s32 1, %s6
  %s9 = scalar_select 0, %s8, %s6
  $region1: #{tpu_custom_call.1} parent=0
    #allocation2 [shape = 'u8[512]{0}', space=vmem, size = 0x400, scoped, tag = 'input window, operand 2, single buffered']
    #allocation3 [shape = 's32[2]{0}', space=sflag, size = 0x8, scoped, tag = 'scoped memory for tpu_custom_call.1']
    #allocation4 [shape = 'u8[40960]{0}', space=vmem, size = 0xa000, scoped, tag = 'input window, operand 3, single buffered']
    #allocation5 [shape = 's32[1]{0}', space=sflag, size = 0x4, scoped, tag = 'scoped memory for tpu_custom_call.1']
    #allocation6 [shape = 'u8[2560]{0}', space=vmem, size = 0xc00, scoped, tag = 'input window, operand 4, single buffered']
    %10 = vsyncpa [#allocation3], 0
    %11 = vsyncpa [#allocation5], 0
    loop: start=0, step=1, limit=6
    $region2: #{tpu_custom_call.1} parent=1 // loop_pre_header
      _
    $region3: #{tpu_custom_call.1} parent=1 // loop_header
      %s13 = sphi 0, %s17
      %p14 = scmp.ge.s32.totalorder %s13, 6
      %s23 = sphi 0, %s25
      %s26 = sphi 0, %s23
      %s27 = sphi 0, %s26
      %s43 = sphi 0, %s27
      %s47 = sphi 0, %s47
      %s49 = sphi 0, %s47
      %s50 = sphi 0, %s49
      %s64 = sphi 0, %s50
      %s68 = sphi 0, %s68
      %s70 = sphi 0, %s68
      %s71 = sphi 0, %s70
      %s85 = sphi 0, %s71
      %s89 = sphi 0, %s89
      %s91 = sphi 0, %s89
      %s92 = sphi 0, %s91
      %s106 = sphi 0, %s92
      %s110 = sphi 0, %s110
      %s112 = sphi 0, %s110
      %s113 = sphi 0, %s112
      %s127 = sphi 0, %s113
      %s133 = sphi 0, %s135
      %s136 = sphi 0, %s133
      %s137 = sphi 0, %s136
      %s153 = sphi 0, %s137
    $region4: #{tpu_custom_call.1} parent=1 // loop_header_branch
      %16 = sbr.rel (%p14) target = $region8
    $region5: #{tpu_custom_call.1} parent=1 // loop_body
      %s18 = ssub.s32 %s13, 1
      %s19 = ssub.s32 %s13, 2
      %s20 = sadd.s32 %s13, 1
      %s21 = ssub.s32 %s13, %s20
      %p22 = scmp.eq.s32.totalorder %s21, 0
      %s24 = sadd.s32 %s23, 1
      %s25 = scalar_select %p22, %s23, %s24
      %p28 = pneg %p22
      %p29 = scmp.eq.s32.totalorder %s13, 3
      %p30 = por %p28, %p29
      %p31 = scmp.ne.s32.totalorder %s23, %s26
      %p32 = scmp.eq.s32.totalorder %s13, 0
      %p33 = por %p31, %p32
      %p34 = scmp.ne.s32.totalorder %s23, %s26
      %p35 = scmp.eq.s32.totalorder %s18, 3
      %p36 = por %p34, %p35
      %p37 = scmp.ne.s32.totalorder %s26, %s27
      %p38 = scmp.eq.s32.totalorder %s18, 0
      %p39 = por %p37, %p38
      %p40 = scmp.ne.s32.totalorder %s26, %s27
      %p41 = scmp.eq.s32.totalorder %s19, 3
      %p42 = por %p40, %p41
      %p44 = scmp.ne.s32.totalorder %s27, %s43
      %p45 = scmp.eq.s32.totalorder %s19, 0
      %p46 = por %p44, %p45
      %s48 = sadd.s32 %s47, 1
      %p51 = scmp.eq.s32.totalorder %s13, 3
      %p52 = scmp.ne.s32.totalorder %s47, %s49
      %p53 = scmp.eq.s32.totalorder %s13, 0
      %p54 = por %p52, %p53
      %p55 = scmp.ne.s32.totalorder %s47, %s49
      %p56 = scmp.eq.s32.totalorder %s18, 3
      %p57 = por %p55, %p56
      %p58 = scmp.ne.s32.totalorder %s49, %s50
      %p59 = scmp.eq.s32.totalorder %s18, 0
      %p60 = por %p58, %p59
      %p61 = scmp.ne.s32.totalorder %s49, %s50
      %p62 = scmp.eq.s32.totalorder %s19, 3
      %p63 = por %p61, %p62
      %p65 = scmp.ne.s32.totalorder %s50, %s64
      %p66 = scmp.eq.s32.totalorder %s19, 0
      %p67 = por %p65, %p66
      %s69 = sadd.s32 %s68, 1
      %p72 = scmp.eq.s32.totalorder %s13, 3
      %p73 = scmp.ne.s32.totalorder %s68, %s70
      %p74 = scmp.eq.s32.totalorder %s13, 0
      %p75 = por %p73, %p74
      %p76 = scmp.ne.s32.totalorder %s68, %s70
      %p77 = scmp.eq.s32.totalorder %s18, 3
      %p78 = por %p76, %p77
      %p79 = scmp.ne.s32.totalorder %s70, %s71
      %p80 = scmp.eq.s32.totalorder %s18, 0
      %p81 = por %p79, %p80
      %p82 = scmp.ne.s32.totalorder %s70, %s71
      %p83 = scmp.eq.s32.totalorder %s19, 3
      %p84 = por %p82, %p83
      %p86 = scmp.ne.s32.totalorder %s71, %s85
      %p87 = scmp.eq.s32.totalorder %s19, 0
      %p88 = por %p86, %p87
      %s90 = sadd.s32 %s89, 1
      %p93 = scmp.eq.s32.totalorder %s13, 3
      %p94 = scmp.ne.s32.totalorder %s89, %s91
      %p95 = scmp.eq.s32.totalorder %s13, 0
      %p96 = por %p94, %p95
      %p97 = scmp.ne.s32.totalorder %s89, %s91
      %p98 = scmp.eq.s32.totalorder %s18, 3
      %p99 = por %p97, %p98
      %p100 = scmp.ne.s32.totalorder %s91, %s92
      %p101 = scmp.eq.s32.totalorder %s18, 0
      %p102 = por %p100, %p101
      %p103 = scmp.ne.s32.totalorder %s91, %s92
      %p104 = scmp.eq.s32.totalorder %s19, 3
      %p105 = por %p103, %p104
      %p107 = scmp.ne.s32.totalorder %s92, %s106
      %p108 = scmp.eq.s32.totalorder %s19, 0
      %p109 = por %p107, %p108
      %s111 = sadd.s32 %s110, 1
      %p114 = scmp.eq.s32.totalorder %s13, 3
      %p115 = scmp.ne.s32.totalorder %s110, %s112
      %p116 = scmp.eq.s32.totalorder %s13, 0
      %p117 = por %p115, %p116
      %p118 = scmp.ne.s32.totalorder %s110, %s112
      %p119 = scmp.eq.s32.totalorder %s18, 3
      %p120 = por %p118, %p119
      %p121 = scmp.ne.s32.totalorder %s112, %s113
      %p122 = scmp.eq.s32.totalorder %s18, 0
      %p123 = por %p121, %p122
      %p124 = scmp.ne.s32.totalorder %s112, %s113
      %p125 = scmp.eq.s32.totalorder %s19, 3
      %p126 = por %p124, %p125
      %p128 = scmp.ne.s32.totalorder %s113, %s127
      %p129 = scmp.eq.s32.totalorder %s19, 0
      %p130 = por %p128, %p129
      %s131 = ssub.s32 %s13, %s20
      %p132 = scmp.eq.s32.totalorder %s131, 0
      %s134 = sadd.s32 %s133, 1
      %s135 = scalar_select %p132, %s133, %s134
      %p138 = pneg %p132
      %p139 = scmp.eq.s32.totalorder %s13, 3
      %p140 = por %p138, %p139
      %p141 = scmp.ne.s32.totalorder %s133, %s136
      %p142 = scmp.eq.s32.totalorder %s13, 0
      %p143 = por %p141, %p142
      %p144 = scmp.ne.s32.totalorder %s133, %s136
      %p145 = scmp.eq.s32.totalorder %s18, 3
      %p146 = por %p144, %p145
      %p147 = scmp.ne.s32.totalorder %s136, %s137
      %p148 = scmp.eq.s32.totalorder %s18, 0
      %p149 = por %p147, %p148
      %p150 = scmp.ne.s32.totalorder %s136, %s137
      %p151 = scmp.eq.s32.totalorder %s19, 3
      %p152 = por %p150, %p151
      %p154 = scmp.ne.s32.totalorder %s137, %s153
      %p155 = scmp.eq.s32.totalorder %s19, 0
      %p156 = por %p154, %p155
      %p157 = scmp.le.s32.totalorder 1, %s13
      %p158 = scmp.lt.s32.totalorder %s13, 5
      %p159 = pnand %p157, %p158
      %p160 = pneg %p159
      // Predicated region
      $region9: #{tpu_custom_call.1} parent=5 // pred_check
        _
      $region10: #{tpu_custom_call.1} parent=5 // pred_check_branch
        %162 = sbr.rel (%p159) target = $region12
      $region11: #{tpu_custom_call.1} parent=5 // pred_region
        %s163 = ssub.s32 %s13, 1
        // Predicated region
        $region13: #{tpu_custom_call.1} parent=11 // pred_check
          %p164 = pneg %p60
        $region14: #{tpu_custom_call.1} parent=11 // pred_check_branch
          %166 = sbr.rel (%p164) target = $region16
        $region15: #{tpu_custom_call.1} parent=11 // pred_region
          _
        $region16: #{tpu_custom_call.1} parent=11 // pred_fallthru
          _
        // Predicated region
        $region17: #{tpu_custom_call.1} parent=11 // pred_check
          %p167 = pneg %p81
        $region18: #{tpu_custom_call.1} parent=11 // pred_check_branch
          %169 = sbr.rel (%p167) target = $region20
        $region19: #{tpu_custom_call.1} parent=11 // pred_region
          %s171 = ssub.s32 16, 16
          %172 = vsyncadd [#allocation3], %s171
          %s174 = sshll.u32 [#allocation2], 4
          %s175 = int_to_ptr.vmem [resolvable:$true] %s174
          %177 = dma.hbm_to_vmem [thread:$0]  %s2, 16, %s175, [#allocation3]
        $region20: #{tpu_custom_call.1} parent=11 // pred_fallthru
          _
        // Predicated region
        $region21: #{tpu_custom_call.1} parent=11 // pred_check
          %p178 = pneg %p102
        $region22: #{tpu_custom_call.1} parent=11 // pred_check_branch
          %180 = sbr.rel (%p178) target = $region24
        $region23: #{tpu_custom_call.1} parent=11 // pred_region
          %s182 = ssub.s32 1280, 1280
          %183 = vsyncadd [#allocation5], %s182
          %s184 = sshll.u32 [#allocation4], 4
          %s185 = int_to_ptr.vmem [resolvable:$true] %s184
          %190 = dma.hbm_to_vmem [thread:$0]  %s3, 1280, %s185, [#allocation5], 320, 320, 20
        $region24: #{tpu_custom_call.1} parent=11 // pred_fallthru
          _
        // Predicated region
        $region25: #{tpu_custom_call.1} parent=11 // pred_check
          %p191 = pneg %p123
        $region26: #{tpu_custom_call.1} parent=11 // pred_check_branch
          %193 = sbr.rel (%p191) target = $region28
        $region27: #{tpu_custom_call.1} parent=11 // pred_region
          %s195 = ssub.s32 80, 80
          %196 = vsyncadd [#allocation5], %s195
          %s198 = sshll.u32 [#allocation6], 4
          %s199 = int_to_ptr.vmem [resolvable:$true] %s198
          %201 = dma.hbm_to_vmem [thread:$0]  %s4, 80, %s199, [#allocation5]
        $region28: #{tpu_custom_call.1} parent=11 // pred_fallthru
          _
      $region12: #{tpu_custom_call.1} parent=5 // pred_fallthru
        _
      %p202 = scmp.lt.s32.totalorder %s13, 4
      // Predicated region
      $region29: #{tpu_custom_call.1} parent=5 // pred_check
        %p203 = pneg %p202
      $region30: #{tpu_custom_call.1} parent=5 // pred_check_branch
        %205 = sbr.rel (%p203) target = $region32
      $region31: #{tpu_custom_call.1} parent=5 // pred_region
        // Predicated region
        $region33: #{tpu_custom_call.1} parent=31 // pred_check
          %p206 = pneg %p33
        $region34: #{tpu_custom_call.1} parent=31 // pred_check_branch
          %208 = sbr.rel (%p206) target = $region36
        $region35: #{tpu_custom_call.1} parent=31 // pred_region
          %s209 = smul.u32 16, %s13
          %p210 = scmp.lt.s32.totalorder %s209, 63
          %s211 = scalar_select %p210, %s209, 63
          %s212 = smul.addr %s211, 4
          %s213 = scalar_lea.vmem %s0, %s212
          %s214 = smul.u32 16, %s13
        $region36: #{tpu_custom_call.1} parent=31 // pred_fallthru
          _
      $region32: #{tpu_custom_call.1} parent=5 // pred_fallthru
        _
      %p215 = scmp.le.s32.totalorder 1, %s13
      %p216 = scmp.lt.s32.totalorder %s13, 5
      %p217 = pnand %p215, %p216
      %p218 = pneg %p217
      // Predicated region
      $region37: #{tpu_custom_call.1} parent=5 // pred_check
        _
      $region38: #{tpu_custom_call.1} parent=5 // pred_check_branch
        %220 = sbr.rel (%p217) target = $region40
      $region39: #{tpu_custom_call.1} parent=5 // pred_region
        %s221 = ssub.s32 %s13, 1
        // Predicated region
        $region41: #{tpu_custom_call.1} parent=39 // pred_check
          %p222 = pneg %p81
        $region42: #{tpu_custom_call.1} parent=39 // pred_check_branch
          %224 = sbr.rel (%p222) target = $region44
        $region43: #{tpu_custom_call.1} parent=39 // pred_region
          %225 = dma.done [#allocation3], 16
        $region44: #{tpu_custom_call.1} parent=39 // pred_fallthru
          _
        // Predicated region
        $region45: #{tpu_custom_call.1} parent=39 // pred_check
          %p226 = pneg %p102
        $region46: #{tpu_custom_call.1} parent=39 // pred_check_branch
          %228 = sbr.rel (%p226) target = $region48
        $region47: #{tpu_custom_call.1} parent=39 // pred_region
          %229 = dma.done [#allocation5], 1280
        $region48: #{tpu_custom_call.1} parent=39 // pred_fallthru
          _
        // Predicated region
        $region49: #{tpu_custom_call.1} parent=39 // pred_check
          %p230 = pneg %p123
        $region50: #{tpu_custom_call.1} parent=39 // pred_check_branch
          %232 = sbr.rel (%p230) target = $region52
        $region51: #{tpu_custom_call.1} parent=39 // pred_region
          %233 = dma.done [#allocation5], 80
        $region52: #{tpu_custom_call.1} parent=39 // pred_fallthru
          _
        %s234 = smul.u32 16, %s18
        %p235 = scmp.lt.s32.totalorder %s234, 63
        %s236 = scalar_select %p235, %s234, 63
        %s237 = smul.addr %s236, 4
        %s238 = scalar_lea.vmem %s0, %s237
        %p239 = pneg %p39
        %p240 = pneg %p36
        %p241 = pneg %p60
        %p242 = pneg %p57
        %p243 = pneg %p81
        %p244 = pneg %p78
        %p245 = pneg %p102
        %p246 = pneg %p99
        %p247 = pneg %p123
        %p248 = pneg %p120
        %p249 = pneg %p149
        %p250 = pneg %p146
        %s251 = smul.u32 16, %s18
        %p252 = scmp.lt.s32.totalorder %s251, 63
        %s253 = scalar_select %p252, %s251, 63
        %s254 = smul.addr %s253, 5
        %s255 = smul.addr %s254, 8
        %s256 = scalar_lea.vmem %s5, %s255
        %s257 = smul.u32 16, %s18
        %p258 = scmp.lt.s32.totalorder %s257, 63
        %s259 = scalar_select %p258, %s257, 63
        %s260 = smul.addr %s259, 4
        %s261 = scalar_lea.vmem %s0, %s260
        %s262 = smul.u32 16, %s18
        %s263 = smul.u32 16, %s18
        %p264 = scmp.lt.s32.totalorder %s263, 63
        %s265 = scalar_select %p264, %s263, 63
        %s266 = smul.addr %s265, 5
        %s267 = smul.addr %s266, 8
        %s268 = scalar_lea.vmem %s5, %s267
        %s269 = smul.u32 16, %s18
        %v271 = vld [vmem:[%s261] sm:$0xf]
        %v272 = vld [vmem:[%s261 + $0x4] sm:$0xf]
        %v273 = vld [vmem:[%s261 + $0x8] sm:$0xf]
        %v274 = vld [vmem:[%s261 + $0xc] sm:$0xf]
        %v275 = vld [vmem:[%s261 + $0x10] sm:$0xf]
        %v276 = vld [vmem:[%s261 + $0x14] sm:$0xf]
        %v277 = vld [vmem:[%s261 + $0x18] sm:$0xf]
        %v278 = vld [vmem:[%s261 + $0x1c] sm:$0xf]
        %v279 = vld [vmem:[%s261 + $0x20] sm:$0xf]
        %v280 = vld [vmem:[%s261 + $0x24] sm:$0xf]
        %v281 = vld [vmem:[%s261 + $0x28] sm:$0xf]
        %v282 = vld [vmem:[%s261 + $0x2c] sm:$0xf]
        %v283 = vld [vmem:[%s261 + $0x30] sm:$0xf]
        %v284 = vld [vmem:[%s261 + $0x34] sm:$0xf]
        %v285 = vld [vmem:[%s261 + $0x38] sm:$0xf]
        %v286 = vld [vmem:[%s261 + $0x3c] sm:$0xf]
        %v287 = vld [vmem:[%s1] sm:$0xf]
        %v288 = vld [vmem:[%s1 + $0x4] sm:$0xf]
        %v289 = vld [vmem:[%s1 + $0x8] sm:$0xf]
        %v290 = vld [vmem:[%s1 + $0xc] sm:$0xf]
        %v291 = vld [vmem:[%s1 + $0x10] sm:$0x3]
        %v292 = vld [vmem:[#allocation2] sm:$0x1]
        %v294 = vlaneseq
        %v295 = vshrl.u32 %v294, 7
        %v296 = vsub.s32 0, %v295
        %v297 = vrot.slane %v292, %v296
        %v315 = vunpack.c.l.b16 %v271
        %v316 = vunpack.c.l.b16 %v272
        %v317 = vunpack.c.l.b16 %v273
        %v318 = vunpack.c.l.b16 %v274
        %v319 = vunpack.c.l.b16 %v275
        %v320 = vunpack.c.l.b16 %v276
        %v321 = vunpack.c.l.b16 %v277
        %v322 = vunpack.c.l.b16 %v278
        %v323 = vunpack.c.l.b16 %v279
        %v324 = vunpack.c.l.b16 %v280
        %v325 = vunpack.c.l.b16 %v281
        %v326 = vunpack.c.l.b16 %v282
        %v327 = vunpack.c.l.b16 %v283
        %v328 = vunpack.c.l.b16 %v284
        %v329 = vunpack.c.l.b16 %v285
        %v330 = vunpack.c.l.b16 %v286
        %v331 = vpack.c.b16 %v316, %v315
        %v332 = vpack.c.b16 %v318, %v317
        %v333 = vpack.c.b16 %v320, %v319
        %v334 = vpack.c.b16 %v322, %v321
        %v335 = vpack.c.b16 %v324, %v323
        %v336 = vpack.c.b16 %v326, %v325
        %v337 = vpack.c.b16 %v328, %v327
        %v338 = vpack.c.b16 %v330, %v329
        %v344 = vunpack.c.l.b16 %v287
        %v345 = vunpack.c.l.b16 %v288
        %v346 = vunpack.c.l.b16 %v289
        %v347 = vunpack.c.l.b16 %v290
        %v348 = vunpack.c.l.b16 %v291
        %v349 = vpack.c.b16 %v345, %v344
        %v350 = vpack.c.b16 %v347, %v346
        %v351 = vpack.c.b16 %v348, %v348
        %vm354 = vcmask 293888
        %v356 = vsel %vm354, %v331, 0
        %v359 = vsel %vm354, %v332, 0
        %v362 = vsel %vm354, %v333, 0
        %v365 = vsel %vm354, %v334, 0
        %v368 = vsel %vm354, %v335, 0
        %v371 = vsel %vm354, %v336, 0
        %v374 = vsel %vm354, %v337, 0
        %v377 = vsel %vm354, %v338, 0
        %vm379 = vcmask 1041408
        %v381 = vsel %vm379, %v351, 0
        %383 = vmatprep.subr.bf16.mxu0 0
        %384 = vmatpush1.bf16.msra.mxu0 %v349
        %385 = vmatprep.subr.bf16.mxu0 0
        %386 = vmatpush1.bf16.msra.mxu0 %v350
        %387 = vmatprep.subr.bf16.mxu0 0
        %388 = vmatpush1.bf16.msra.mxu0 %v381
        %389 = vmatprep.subr.bf16.mxu0 0
        %390 = vmatpush1.bf16.msra.mxu0 0
        %391 = vmatprep.subr.bf16.mxu0 0
        %392 = vmatpush1.bf16.msra.mxu0 0
        %393 = vmatprep.subr.bf16.mxu0 0
        %394 = vmatpush1.bf16.msra.mxu0 0
        %395 = vmatprep.subr.bf16.mxu0 0
        %396 = vmatpush1.bf16.msra.mxu0 0
        %397 = vmatprep.subr.bf16.mxu0 0
        %398 = vmatpush1.bf16.msra.mxu0 0
        %399 = vmatprep.subr.bf16.mxu0 0
        %400 = vmatpush1.bf16.msra.mxu0 0
        %401 = vmatprep.subr.bf16.mxu0 0
        %402 = vmatpush1.bf16.msra.mxu0 0
        %403 = vmatprep.subr.bf16.mxu0 0
        %404 = vmatpush1.bf16.msra.mxu0 0
        %405 = vmatprep.subr.bf16.mxu0 0
        %406 = vmatpush1.bf16.msra.mxu0 0
        %407 = vmatprep.subr.bf16.mxu0 0
        %408 = vmatpush1.bf16.msra.mxu0 0
        %409 = vmatprep.subr.bf16.mxu0 0
        %410 = vmatpush1.bf16.msra.mxu0 0
        %411 = vmatprep.subr.bf16.mxu0 0
        %412 = vmatpush1.bf16.msra.mxu0 0
        %413 = vmatprep.subr.bf16.mxu0 0
        %414 = vmatpush1.bf16.msra.mxu0 0
        %415 = vmatprep.mubr.bf16.mxu0 0
        %416 = vmatmul.mubr.bf16.gmra.mrb[0].mxu0 %v356
        %v417 = vpop.f32.mrb[0].mxu0
        %v418 = vadd.f32 %v297, %v417
        %v419 = vpop.f32.mrb[0].mxu0
        %v420 = vpop.f32.mrb[0].mxu0
        %v421 = vadd.f32 %v297, %v420
        %v422 = vpop.f32.mrb[0].mxu0
        %423 = vmatprep.mubr.bf16.mxu0 0
        %424 = vmatmul.mubr.bf16.gmra.mrb[0].mxu0 %v359
        %v425 = vpop.f32.mrb[0].mxu0
        %v426 = vadd.f32 %v297, %v425
        %v427 = vpop.f32.mrb[0].mxu0
        %v428 = vpop.f32.mrb[0].mxu0
        %v429 = vadd.f32 %v297, %v428
        %v430 = vpop.f32.mrb[0].mxu0
        %431 = vmatprep.mubr.bf16.mxu0 0
        %432 = vmatmul.mubr.bf16.gmra.mrb[0].mxu0 %v362
        %v433 = vpop.f32.mrb[0].mxu0
        %v434 = vadd.f32 %v297, %v433
        %v435 = vpop.f32.mrb[0].mxu0
        %v436 = vpop.f32.mrb[0].mxu0
        %v437 = vadd.f32 %v297, %v436
        %v438 = vpop.f32.mrb[0].mxu0
        %439 = vmatprep.mubr.bf16.mxu0 0
        %440 = vmatmul.mubr.bf16.gmra.mrb[0].mxu0 %v365
        %v441 = vpop.f32.mrb[0].mxu0
        %v442 = vadd.f32 %v297, %v441
        %v443 = vpop.f32.mrb[0].mxu0
        %v444 = vpop.f32.mrb[0].mxu0
        %v445 = vadd.f32 %v297, %v444
        %v446 = vpop.f32.mrb[0].mxu0
        %447 = vmatprep.mubr.bf16.mxu0 0
        %448 = vmatmul.mubr.bf16.gmra.mrb[0].mxu0 %v368
        %v449 = vpop.f32.mrb[0].mxu0
        %v450 = vadd.f32 %v297, %v449
        %v451 = vpop.f32.mrb[0].mxu0
        %v452 = vpop.f32.mrb[0].mxu0
        %v453 = vadd.f32 %v297, %v452
        %v454 = vpop.f32.mrb[0].mxu0
        %455 = vmatprep.mubr.bf16.mxu0 0
        %456 = vmatmul.mubr.bf16.gmra.mrb[0].mxu0 %v371
        %v457 = vpop.f32.mrb[0].mxu0
        %v458 = vadd.f32 %v297, %v457
        %v459 = vpop.f32.mrb[0].mxu0
        %v460 = vpop.f32.mrb[0].mxu0
        %v461 = vadd.f32 %v297, %v460
        %v462 = vpop.f32.mrb[0].mxu0
        %463 = vmatprep.mubr.bf16.mxu0 0
        %464 = vmatmul.mubr.bf16.gmra.mrb[0].mxu0 %v374
        %v465 = vpop.f32.mrb[0].mxu0
        %v466 = vadd.f32 %v297, %v465
        %v467 = vpop.f32.mrb[0].mxu0
        %v468 = vpop.f32.mrb[0].mxu0
        %v469 = vadd.f32 %v297, %v468
        %v470 = vpop.f32.mrb[0].mxu0
        %471 = vmatprep.mubr.bf16.mxu0 0
        %472 = vmatmul.mubr.bf16.gmra.mrb[0].mxu0 %v377
        %v473 = vpop.f32.mrb[0].mxu0
        %v474 = vadd.f32 %v297, %v473
        %v475 = vpop.f32.mrb[0].mxu0
        %v476 = vpop.f32.mrb[0].mxu0
        %v477 = vadd.f32 %v297, %v476
        %v478 = vpop.f32.mrb[0].mxu0
        %479 = vdwg.mxu0
        %v480 = vmax.f32 %v418, 0.0
        %v481 = vmax.f32 %v421, 0.0
        %v482 = vmax.f32 %v426, 0.0
        %v483 = vmax.f32 %v429, 0.0
        %v484 = vmax.f32 %v434, 0.0
        %v485 = vmax.f32 %v437, 0.0
        %v486 = vmax.f32 %v442, 0.0
        %v487 = vmax.f32 %v445, 0.0
        %v488 = vmax.f32 %v450, 0.0
        %v489 = vmax.f32 %v453, 0.0
        %v490 = vmax.f32 %v458, 0.0
        %v491 = vmax.f32 %v461, 0.0
        %v492 = vmax.f32 %v466, 0.0
        %v493 = vmax.f32 %v469, 0.0
        %v494 = vmax.f32 %v474, 0.0
        %v495 = vmax.f32 %v477, 0.0
        %v496 = vpack.c.bf16 %v481, %v480
        %v497 = vpack.c.bf16 %v483, %v482
        %v498 = vpack.c.bf16 %v485, %v484
        %v499 = vpack.c.bf16 %v487, %v486
        %v500 = vpack.c.bf16 %v489, %v488
        %v501 = vpack.c.bf16 %v491, %v490
        %v502 = vpack.c.bf16 %v493, %v492
        %v503 = vpack.c.bf16 %v495, %v494
        %v504 = vld [vmem:[#allocation4] sm:$0xff]
        %v505 = vld [vmem:[#allocation4 + $0x8] sm:$0xff]
        %v506 = vld [vmem:[#allocation4 + $0x10] sm:$0xf]
        %v507 = vld [vmem:[#allocation4 + $0x14] sm:$0xff]
        %v508 = vld [vmem:[#allocation4 + $0x1c] sm:$0xff]
        %v509 = vld [vmem:[#allocation4 + $0x24] sm:$0xf]
        %v510 = vld [vmem:[#allocation4 + $0x28] sm:$0xff]
        %v511 = vld [vmem:[#allocation4 + $0x30] sm:$0xff]
        %v512 = vld [vmem:[#allocation4 + $0x38] sm:$0xf]
        %v513 = vld [vmem:[#allocation4 + $0x3c] sm:$0xff]
        %v514 = vld [vmem:[#allocation4 + $0x44] sm:$0xff]
        %v515 = vld [vmem:[#allocation4 + $0x4c] sm:$0xf]
        %v516 = vld [vmem:[#allocation6] sm:$0x1f]
        %v518 = vlaneseq
        %v519 = vshrl.u32 %v518, 7
        %v520 = vsub.s32 0, %v519
        %v521 = vrot.slane %v516, %v520
        %v522 = vlaneseq
        %v523 = vshrl.u32 %v522, 7
        %v524 = vsub.s32 1, %v523
        %v525 = vrot.slane %v516, %v524
        %v526 = vlaneseq
        %v527 = vshrl.u32 %v526, 7
        %v528 = vsub.s32 2, %v527
        %v529 = vrot.slane %v516, %v528
        %v530 = vlaneseq
        %v531 = vshrl.u32 %v530, 7
        %v532 = vsub.s32 3, %v531
        %v533 = vrot.slane %v516, %v532
        %v534 = vlaneseq
        %v535 = vshrl.u32 %v534, 7
        %v536 = vsub.s32 4, %v535
        %v537 = vrot.slane %v516, %v536
        %v555 = vunpack.c.l.b16 %v504
        %v556 = vunpack.c.h.b16 %v504
        %v557 = vunpack.c.l.b16 %v505
        %v558 = vunpack.c.h.b16 %v505
        %v559 = vunpack.c.l.b16 %v506
        %v560 = vunpack.c.l.b16 %v507
        %v561 = vunpack.c.h.b16 %v507
        %v562 = vunpack.c.l.b16 %v508
        %v563 = vunpack.c.h.b16 %v508
        %v564 = vunpack.c.l.b16 %v509
        %v565 = vunpack.c.l.b16 %v510
        %v566 = vunpack.c.h.b16 %v510
        %v567 = vunpack.c.l.b16 %v511
        %v568 = vunpack.c.h.b16 %v511
        %v569 = vunpack.c.l.b16 %v512
        %v570 = vunpack.c.l.b16 %v513
        %v571 = vunpack.c.h.b16 %v513
        %v572 = vunpack.c.l.b16 %v514
        %v573 = vunpack.c.h.b16 %v514
        %v574 = vunpack.c.l.b16 %v515
        %v575 = vpack.c.b16 %v560, %v555
        %v576 = vpack.c.b16 %v561, %v556
        %v577 = vpack.c.b16 %v562, %v557
        %v578 = vpack.c.b16 %v563, %v558
        %v579 = vpack.c.b16 %v564, %v559
        %v580 = vpack.c.b16 %v570, %v565
        %v581 = vpack.c.b16 %v571, %v566
        %v582 = vpack.c.b16 %v572, %v567
        %v583 = vpack.c.b16 %v573, %v568
        %v584 = vpack.c.b16 %v574, %v569
        %vm595 = vcmask 261120
        %v597 = vsel %vm595, %v496, 0
        %v600 = vsel %vm595, %v497, 0
        %v603 = vsel %vm595, %v498, 0
        %v606 = vsel %vm595, %v499, 0
        %v609 = vsel %vm595, %v500, 0
        %v612 = vsel %vm595, %v501, 0
        %v615 = vsel %vm595, %v502, 0
        %v618 = vsel %vm595, %v503, 0
        %620 = vmatprep.subr.bf16.mxu0 %v576
        %621 = vmatpush1.bf16.msra.mxu0 %v575
        %622 = vmatprep.subr.bf16.mxu0 %v581
        %623 = vmatpush1.bf16.msra.mxu0 %v580
        %624 = vmatprep.subr.bf16.mxu0 0
        %625 = vmatpush1.bf16.msra.mxu0 0
        %626 = vmatprep.subr.bf16.mxu0 0
        %627 = vmatpush1.bf16.msra.mxu0 0
        %628 = vmatprep.subr.bf16.mxu0 0
        %629 = vmatpush1.bf16.msra.mxu0 0
        %630 = vmatprep.subr.bf16.mxu0 0
        %631 = vmatpush1.bf16.msra.mxu0 0
        %632 = vmatprep.subr.bf16.mxu0 0
        %633 = vmatpush1.bf16.msra.mxu0 0
        %634 = vmatprep.subr.bf16.mxu0 0
        %635 = vmatpush1.bf16.msra.mxu0 0
        %636 = vmatprep.subr.bf16.mxu0 0
        %637 = vmatpush1.bf16.msra.mxu0 0
        %638 = vmatprep.subr.bf16.mxu0 0
        %639 = vmatpush1.bf16.msra.mxu0 0
        %640 = vmatprep.subr.bf16.mxu0 0
        %641 = vmatpush1.bf16.msra.mxu0 0
        %642 = vmatprep.subr.bf16.mxu0 0
        %643 = vmatpush1.bf16.msra.mxu0 0
        %644 = vmatprep.subr.bf16.mxu0 0
        %645 = vmatpush1.bf16.msra.mxu0 0
        %646 = vmatprep.subr.bf16.mxu0 0
        %647 = vmatpush1.bf16.msra.mxu0 0
        %648 = vmatprep.subr.bf16.mxu0 0
        %649 = vmatpush1.bf16.msra.mxu0 0
        %650 = vmatprep.subr.bf16.mxu0 0
        %651 = vmatpush1.bf16.msra.mxu0 0
        %652 = vmatprep.mubr.bf16.mxu0 0
        %653 = vmatmul.mubr.bf16.gmra.mrb[0].mxu0 %v597
        %v654 = vpop.f32.mrb[0].mxu0
        %v655 = vadd.f32 %v521, %v654
        %v656 = vpop.f32.mrb[0].mxu0
        %v657 = vadd.f32 %v525, %v656
        %v658 = vpop.f32.mrb[0].mxu0
        %v659 = vadd.f32 %v521, %v658
        %v660 = vpop.f32.mrb[0].mxu0
        %v661 = vadd.f32 %v525, %v660
        %662 = vmatprep.mubr.bf16.mxu0 0
        %663 = vmatmul.mubr.bf16.gmra.mrb[0].mxu0 %v600
        %v664 = vpop.f32.mrb[0].mxu0
        %v665 = vadd.f32 %v521, %v664
        %v666 = vpop.f32.mrb[0].mxu0
        %v667 = vadd.f32 %v525, %v666
        %v668 = vpop.f32.mrb[0].mxu0
        %v669 = vadd.f32 %v521, %v668
        %v670 = vpop.f32.mrb[0].mxu0
        %v671 = vadd.f32 %v525, %v670
        %672 = vmatprep.mubr.bf16.mxu0 0
        %673 = vmatmul.mubr.bf16.gmra.mrb[0].mxu0 %v603
        %v674 = vpop.f32.mrb[0].mxu0
        %v675 = vadd.f32 %v521, %v674
        %v676 = vpop.f32.mrb[0].mxu0
        %v677 = vadd.f32 %v525, %v676
        %v678 = vpop.f32.mrb[0].mxu0
        %v679 = vadd.f32 %v521, %v678
        %v680 = vpop.f32.mrb[0].mxu0
        %v681 = vadd.f32 %v525, %v680
        %682 = vmatprep.mubr.bf16.mxu0 0
        %683 = vmatmul.mubr.bf16.gmra.mrb[0].mxu0 %v606
        %v684 = vpop.f32.mrb[0].mxu0
        %v685 = vadd.f32 %v521, %v684
        %v686 = vpop.f32.mrb[0].mxu0
        %v687 = vadd.f32 %v525, %v686
        %v688 = vpop.f32.mrb[0].mxu0
        %v689 = vadd.f32 %v521, %v688
        %v690 = vpop.f32.mrb[0].mxu0
        %v691 = vadd.f32 %v525, %v690
        %692 = vmatprep.mubr.bf16.mxu0 0
        %693 = vmatmul.mubr.bf16.gmra.mrb[0].mxu0 %v609
        %v694 = vpop.f32.mrb[0].mxu0
        %v695 = vadd.f32 %v521, %v694
        %v696 = vpop.f32.mrb[0].mxu0
        %v697 = vadd.f32 %v525, %v696
        %v698 = vpop.f32.mrb[0].mxu0
        %v699 = vadd.f32 %v521, %v698
        %v700 = vpop.f32.mrb[0].mxu0
        %v701 = vadd.f32 %v525, %v700
        %702 = vmatprep.mubr.bf16.mxu0 0
        %703 = vmatmul.mubr.bf16.gmra.mrb[0].mxu0 %v612
        %v704 = vpop.f32.mrb[0].mxu0
        %v705 = vadd.f32 %v521, %v704
        %v706 = vpop.f32.mrb[0].mxu0
        %v707 = vadd.f32 %v525, %v706
        %v708 = vpop.f32.mrb[0].mxu0
        %v709 = vadd.f32 %v521, %v708
        %v710 = vpop.f32.mrb[0].mxu0
        %v711 = vadd.f32 %v525, %v710
        %712 = vmatprep.mubr.bf16.mxu0 0
        %713 = vmatmul.mubr.bf16.gmra.mrb[0].mxu0 %v615
        %v714 = vpop.f32.mrb[0].mxu0
        %v715 = vadd.f32 %v521, %v714
        %v716 = vpop.f32.mrb[0].mxu0
        %v717 = vadd.f32 %v525, %v716
        %v718 = vpop.f32.mrb[0].mxu0
        %v719 = vadd.f32 %v521, %v718
        %v720 = vpop.f32.mrb[0].mxu0
        %v721 = vadd.f32 %v525, %v720
        %722 = vmatprep.mubr.bf16.mxu0 0
        %723 = vmatmul.mubr.bf16.gmra.mrb[0].mxu0 %v618
        %v724 = vpop.f32.mrb[0].mxu0
        %v725 = vadd.f32 %v521, %v724
        %v726 = vpop.f32.mrb[0].mxu0
        %v727 = vadd.f32 %v525, %v726
        %v728 = vpop.f32.mrb[0].mxu0
        %v729 = vadd.f32 %v521, %v728
        %v730 = vpop.f32.mrb[0].mxu0
        %v731 = vadd.f32 %v525, %v730
        %732 = vdwg.mxu0
        %733 = vmatprep.subr.bf16.mxu0 %v578
        %734 = vmatpush1.bf16.msra.mxu0 %v577
        %735 = vmatprep.subr.bf16.mxu0 %v583
        %736 = vmatpush1.bf16.msra.mxu0 %v582
        %737 = vmatprep.subr.bf16.mxu0 0
        %738 = vmatpush1.bf16.msra.mxu0 0
        %739 = vmatprep.subr.bf16.mxu0 0
        %740 = vmatpush1.bf16.msra.mxu0 0
        %741 = vmatprep.subr.bf16.mxu0 0
        %742 = vmatpush1.bf16.msra.mxu0 0
        %743 = vmatprep.subr.bf16.mxu0 0
        %744 = vmatpush1.bf16.msra.mxu0 0
        %745 = vmatprep.subr.bf16.mxu0 0
        %746 = vmatpush1.bf16.msra.mxu0 0
        %747 = vmatprep.subr.bf16.mxu0 0
        %748 = vmatpush1.bf16.msra.mxu0 0
        %749 = vmatprep.subr.bf16.mxu0 0
        %750 = vmatpush1.bf16.msra.mxu0 0
        %751 = vmatprep.subr.bf16.mxu0 0
        %752 = vmatpush1.bf16.msra.mxu0 0
        %753 = vmatprep.subr.bf16.mxu0 0
        %754 = vmatpush1.bf16.msra.mxu0 0
        %755 = vmatprep.subr.bf16.mxu0 0
        %756 = vmatpush1.bf16.msra.mxu0 0
        %757 = vmatprep.subr.bf16.mxu0 0
        %758 = vmatpush1.bf16.msra.mxu0 0
        %759 = vmatprep.subr.bf16.mxu0 0
        %760 = vmatpush1.bf16.msra.mxu0 0
        %761 = vmatprep.subr.bf16.mxu0 0
        %762 = vmatpush1.bf16.msra.mxu0 0
        %763 = vmatprep.subr.bf16.mxu0 0
        %764 = vmatpush1.bf16.msra.mxu0 0
        %765 = vmatprep.mubr.bf16.mxu0 0
        %766 = vmatmul.mubr.bf16.gmra.mrb[0].mxu0 %v597
        %v767 = vpop.f32.mrb[0].mxu0
        %v768 = vadd.f32 %v529, %v767
        %v769 = vpop.f32.mrb[0].mxu0
        %v770 = vadd.f32 %v533, %v769
        %v771 = vpop.f32.mrb[0].mxu0
        %v772 = vadd.f32 %v529, %v771
        %v773 = vpop.f32.mrb[0].mxu0
        %v774 = vadd.f32 %v533, %v773
        %775 = vmatprep.mubr.bf16.mxu0 0
        %776 = vmatmul.mubr.bf16.gmra.mrb[0].mxu0 %v600
        %v777 = vpop.f32.mrb[0].mxu0
        %v778 = vadd.f32 %v529, %v777
        %v779 = vpop.f32.mrb[0].mxu0
        %v780 = vadd.f32 %v533, %v779
        %v781 = vpop.f32.mrb[0].mxu0
        %v782 = vadd.f32 %v529, %v781
        %v783 = vpop.f32.mrb[0].mxu0
        %v784 = vadd.f32 %v533, %v783
        %785 = vmatprep.mubr.bf16.mxu0 0
        %786 = vmatmul.mubr.bf16.gmra.mrb[0].mxu0 %v603
        %v787 = vpop.f32.mrb[0].mxu0
        %v788 = vadd.f32 %v529, %v787
        %v789 = vpop.f32.mrb[0].mxu0
        %v790 = vadd.f32 %v533, %v789
        %v791 = vpop.f32.mrb[0].mxu0
        %v792 = vadd.f32 %v529, %v791
        %v793 = vpop.f32.mrb[0].mxu0
        %v794 = vadd.f32 %v533, %v793
        %795 = vmatprep.mubr.bf16.mxu0 0
        %796 = vmatmul.mubr.bf16.gmra.mrb[0].mxu0 %v606
        %v797 = vpop.f32.mrb[0].mxu0
        %v798 = vadd.f32 %v529, %v797
        %v799 = vpop.f32.mrb[0].mxu0
        %v800 = vadd.f32 %v533, %v799
        %v801 = vpop.f32.mrb[0].mxu0
        %v802 = vadd.f32 %v529, %v801
        %v803 = vpop.f32.mrb[0].mxu0
        %v804 = vadd.f32 %v533, %v803
        %805 = vmatprep.mubr.bf16.mxu0 0
        %806 = vmatmul.mubr.bf16.gmra.mrb[0].mxu0 %v609
        %v807 = vpop.f32.mrb[0].mxu0
        %v808 = vadd.f32 %v529, %v807
        %v809 = vpop.f32.mrb[0].mxu0
        %v810 = vadd.f32 %v533, %v809
        %v811 = vpop.f32.mrb[0].mxu0
        %v812 = vadd.f32 %v529, %v811
        %v813 = vpop.f32.mrb[0].mxu0
        %v814 = vadd.f32 %v533, %v813
        %815 = vmatprep.mubr.bf16.mxu0 0
        %816 = vmatmul.mubr.bf16.gmra.mrb[0].mxu0 %v612
        %v817 = vpop.f32.mrb[0].mxu0
        %v818 = vadd.f32 %v529, %v817
        %v819 = vpop.f32.mrb[0].mxu0
        %v820 = vadd.f32 %v533, %v819
        %v821 = vpop.f32.mrb[0].mxu0
        %v822 = vadd.f32 %v529, %v821
        %v823 = vpop.f32.mrb[0].mxu0
        %v824 = vadd.f32 %v533, %v823
        %825 = vmatprep.mubr.bf16.mxu0 0
        %826 = vmatmul.mubr.bf16.gmra.mrb[0].mxu0 %v615
        %v827 = vpop.f32.mrb[0].mxu0
        %v828 = vadd.f32 %v529, %v827
        %v829 = vpop.f32.mrb[0].mxu0
        %v830 = vadd.f32 %v533, %v829
        %v831 = vpop.f32.mrb[0].mxu0
        %v832 = vadd.f32 %v529, %v831
        %v833 = vpop.f32.mrb[0].mxu0
        %v834 = vadd.f32 %v533, %v833
        %835 = vmatprep.mubr.bf16.mxu0 0
        %836 = vmatmul.mubr.bf16.gmra.mrb[0].mxu0 %v618
        %v837 = vpop.f32.mrb[0].mxu0
        %v838 = vadd.f32 %v529, %v837
        %v839 = vpop.f32.mrb[0].mxu0
        %v840 = vadd.f32 %v533, %v839
        %v841 = vpop.f32.mrb[0].mxu0
        %v842 = vadd.f32 %v529, %v841
        %v843 = vpop.f32.mrb[0].mxu0
        %v844 = vadd.f32 %v533, %v843
        %845 = vdwg.mxu0
        %846 = vmatprep.subr.bf16.mxu0 0
        %847 = vmatpush1.bf16.msra.mxu0 %v579
        %848 = vmatprep.subr.bf16.mxu0 0
        %849 = vmatpush1.bf16.msra.mxu0 %v584
        %850 = vmatprep.subr.bf16.mxu0 0
        %851 = vmatpush1.bf16.msra.mxu0 0
        %852 = vmatprep.subr.bf16.mxu0 0
        %853 = vmatpush1.bf16.msra.mxu0 0
        %854 = vmatprep.subr.bf16.mxu0 0
        %855 = vmatpush1.bf16.msra.mxu0 0
        %856 = vmatprep.subr.bf16.mxu0 0
        %857 = vmatpush1.bf16.msra.mxu0 0
        %858 = vmatprep.subr.bf16.mxu0 0
        %859 = vmatpush1.bf16.msra.mxu0 0
        %860 = vmatprep.subr.bf16.mxu0 0
        %861 = vmatpush1.bf16.msra.mxu0 0
        %862 = vmatprep.subr.bf16.mxu0 0
        %863 = vmatpush1.bf16.msra.mxu0 0
        %864 = vmatprep.subr.bf16.mxu0 0
        %865 = vmatpush1.bf16.msra.mxu0 0
        %866 = vmatprep.subr.bf16.mxu0 0
        %867 = vmatpush1.bf16.msra.mxu0 0
        %868 = vmatprep.subr.bf16.mxu0 0
        %869 = vmatpush1.bf16.msra.mxu0 0
        %870 = vmatprep.subr.bf16.mxu0 0
        %871 = vmatpush1.bf16.msra.mxu0 0
        %872 = vmatprep.subr.bf16.mxu0 0
        %873 = vmatpush1.bf16.msra.mxu0 0
        %874 = vmatprep.subr.bf16.mxu0 0
        %875 = vmatpush1.bf16.msra.mxu0 0
        %876 = vmatprep.subr.bf16.mxu0 0
        %877 = vmatpush1.bf16.msra.mxu0 0
        %878 = vmatprep.mubr.bf16.mxu0 0
        %879 = vmatmul.mubr.bf16.gmra.mrb[0].mxu0 %v597
        %v880 = vpop.f32.mrb[0].mxu0
        %v881 = vadd.f32 %v537, %v880
        %v882 = vpop.f32.mrb[0].mxu0
        %v883 = vpop.f32.mrb[0].mxu0
        %v884 = vadd.f32 %v537, %v883
        %v885 = vpop.f32.mrb[0].mxu0
        %886 = vmatprep.mubr.bf16.mxu0 0
        %887 = vmatmul.mubr.bf16.gmra.mrb[0].mxu0 %v600
        %v888 = vpop.f32.mrb[0].mxu0
        %v889 = vadd.f32 %v537, %v888
        %v890 = vpop.f32.mrb[0].mxu0
        %v891 = vpop.f32.mrb[0].mxu0
        %v892 = vadd.f32 %v537, %v891
        %v893 = vpop.f32.mrb[0].mxu0
        %894 = vmatprep.mubr.bf16.mxu0 0
        %895 = vmatmul.mubr.bf16.gmra.mrb[0].mxu0 %v603
        %v896 = vpop.f32.mrb[0].mxu0
        %v897 = vadd.f32 %v537, %v896
        %v898 = vpop.f32.mrb[0].mxu0
        %v899 = vpop.f32.mrb[0].mxu0
        %v900 = vadd.f32 %v537, %v899
        %v901 = vpop.f32.mrb[0].mxu0
        %902 = vmatprep.mubr.bf16.mxu0 0
        %903 = vmatmul.mubr.bf16.gmra.mrb[0].mxu0 %v606
        %v904 = vpop.f32.mrb[0].mxu0
        %v905 = vadd.f32 %v537, %v904
        %v906 = vpop.f32.mrb[0].mxu0
        %v907 = vpop.f32.mrb[0].mxu0
        %v908 = vadd.f32 %v537, %v907
        %v909 = vpop.f32.mrb[0].mxu0
        %910 = vmatprep.mubr.bf16.mxu0 0
        %911 = vmatmul.mubr.bf16.gmra.mrb[0].mxu0 %v609
        %v912 = vpop.f32.mrb[0].mxu0
        %v913 = vadd.f32 %v537, %v912
        %v914 = vpop.f32.mrb[0].mxu0
        %v915 = vpop.f32.mrb[0].mxu0
        %v916 = vadd.f32 %v537, %v915
        %v917 = vpop.f32.mrb[0].mxu0
        %918 = vmatprep.mubr.bf16.mxu0 0
        %919 = vmatmul.mubr.bf16.gmra.mrb[0].mxu0 %v612
        %v920 = vpop.f32.mrb[0].mxu0
        %v921 = vadd.f32 %v537, %v920
        %v922 = vpop.f32.mrb[0].mxu0
        %v923 = vpop.f32.mrb[0].mxu0
        %v924 = vadd.f32 %v537, %v923
        %v925 = vpop.f32.mrb[0].mxu0
        %926 = vmatprep.mubr.bf16.mxu0 0
        %927 = vmatmul.mubr.bf16.gmra.mrb[0].mxu0 %v615
        %v928 = vpop.f32.mrb[0].mxu0
        %v929 = vadd.f32 %v537, %v928
        %v930 = vpop.f32.mrb[0].mxu0
        %v931 = vpop.f32.mrb[0].mxu0
        %v932 = vadd.f32 %v537, %v931
        %v933 = vpop.f32.mrb[0].mxu0
        %934 = vmatprep.mubr.bf16.mxu0 0
        %935 = vmatmul.mubr.bf16.gmra.mrb[0].mxu0 %v618
        %v936 = vpop.f32.mrb[0].mxu0
        %v937 = vadd.f32 %v537, %v936
        %v938 = vpop.f32.mrb[0].mxu0
        %v939 = vpop.f32.mrb[0].mxu0
        %v940 = vadd.f32 %v537, %v939
        %v941 = vpop.f32.mrb[0].mxu0
        %942 = vdwg.mxu0
        %943 = vst [vmem:[%s268] sm:$0xff] %v655
        %944 = vst [vmem:[%s268 + $0x8] sm:$0xff] %v657
        %945 = vst [vmem:[%s268 + $0x10] sm:$0xff] %v768
        %946 = vst [vmem:[%s268 + $0x18] sm:$0xff] %v770
        %vm947 = vcmask 523264
        %948 = vst.msk [vmem:[%s268 + $0x20] sm:$0xff] %vm947, %v881
        %949 = vst [vmem:[%s268 + $0x28] sm:$0xff] %v659
        %950 = vst [vmem:[%s268 + $0x30] sm:$0xff] %v661
        %951 = vst [vmem:[%s268 + $0x38] sm:$0xff] %v772
        %952 = vst [vmem:[%s268 + $0x40] sm:$0xff] %v774
        %953 = vst.msk [vmem:[%s268 + $0x48] sm:$0xff] %vm947, %v884
        %954 = vst [vmem:[%s268 + $0x50] sm:$0xff] %v665
        %955 = vst [vmem:[%s268 + $0x58] sm:$0xff] %v667
        %956 = vst [vmem:[%s268 + $0x60] sm:$0xff] %v778
        %957 = vst [vmem:[%s268 + $0x68] sm:$0xff] %v780
        %958 = vst.msk [vmem:[%s268 + $0x70] sm:$0xff] %vm947, %v889
        %959 = vst [vmem:[%s268 + $0x78] sm:$0xff] %v669
        %960 = vst [vmem:[%s268 + $0x80] sm:$0xff] %v671
        %961 = vst [vmem:[%s268 + $0x88] sm:$0xff] %v782
        %962 = vst [vmem:[%s268 + $0x90] sm:$0xff] %v784
        %963 = vst.msk [vmem:[%s268 + $0x98] sm:$0xff] %vm947, %v892
        %964 = vst [vmem:[%s268 + $0xa0] sm:$0xff] %v675
        %965 = vst [vmem:[%s268 + $0xa8] sm:$0xff] %v677
        %966 = vst [vmem:[%s268 + $0xb0] sm:$0xff] %v788
        %967 = vst [vmem:[%s268 + $0xb8] sm:$0xff] %v790
        %968 = vst.msk [vmem:[%s268 + $0xc0] sm:$0xff] %vm947, %v897
        %969 = vst [vmem:[%s268 + $0xc8] sm:$0xff] %v679
        %970 = vst [vmem:[%s268 + $0xd0] sm:$0xff] %v681
        %971 = vst [vmem:[%s268 + $0xd8] sm:$0xff] %v792
        %972 = vst [vmem:[%s268 + $0xe0] sm:$0xff] %v794
        %973 = vst.msk [vmem:[%s268 + $0xe8] sm:$0xff] %vm947, %v900
        %974 = vst [vmem:[%s268 + $0xf0] sm:$0xff] %v685
        %975 = vst [vmem:[%s268 + $0xf8] sm:$0xff] %v687
        %976 = vst [vmem:[%s268 + $0x100] sm:$0xff] %v798
        %977 = vst [vmem:[%s268 + $0x108] sm:$0xff] %v800
        %978 = vst.msk [vmem:[%s268 + $0x110] sm:$0xff] %vm947, %v905
        %979 = vst [vmem:[%s268 + $0x118] sm:$0xff] %v689
        %980 = vst [vmem:[%s268 + $0x120] sm:$0xff] %v691
        %981 = vst [vmem:[%s268 + $0x128] sm:$0xff] %v802
        %982 = vst [vmem:[%s268 + $0x130] sm:$0xff] %v804
        %983 = vst.msk [vmem:[%s268 + $0x138] sm:$0xff] %vm947, %v908
        %984 = vst [vmem:[%s268 + $0x140] sm:$0xff] %v695
        %985 = vst [vmem:[%s268 + $0x148] sm:$0xff] %v697
        %986 = vst [vmem:[%s268 + $0x150] sm:$0xff] %v808
        %987 = vst [vmem:[%s268 + $0x158] sm:$0xff] %v810
        %988 = vst.msk [vmem:[%s268 + $0x160] sm:$0xff] %vm947, %v913
        %989 = vst [vmem:[%s268 + $0x168] sm:$0xff] %v699
        %990 = vst [vmem:[%s268 + $0x170] sm:$0xff] %v701
        %991 = vst [vmem:[%s268 + $0x178] sm:$0xff] %v812
        %992 = vst [vmem:[%s268 + $0x180] sm:$0xff] %v814
        %993 = vst.msk [vmem:[%s268 + $0x188] sm:$0xff] %vm947, %v916
        %994 = vst [vmem:[%s268 + $0x190] sm:$0xff] %v705
        %995 = vst [vmem:[%s268 + $0x198] sm:$0xff] %v707
        %996 = vst [vmem:[%s268 + $0x1a0] sm:$0xff] %v818
        %997 = vst [vmem:[%s268 + $0x1a8] sm:$0xff] %v820
        %998 = vst.msk [vmem:[%s268 + $0x1b0] sm:$0xff] %vm947, %v921
        %999 = vst [vmem:[%s268 + $0x1b8] sm:$0xff] %v709
        %1000 = vst [vmem:[%s268 + $0x1c0] sm:$0xff] %v711
        %1001 = vst [vmem:[%s268 + $0x1c8] sm:$0xff] %v822
        %1002 = vst [vmem:[%s268 + $0x1d0] sm:$0xff] %v824
        %1003 = vst.msk [vmem:[%s268 + $0x1d8] sm:$0xff] %vm947, %v924
        %1004 = vst [vmem:[%s268 + $0x1e0] sm:$0xff] %v715
        %1005 = vst [vmem:[%s268 + $0x1e8] sm:$0xff] %v717
        %1006 = vst [vmem:[%s268 + $0x1f0] sm:$0xff] %v828
        %1007 = vst [vmem:[%s268 + $0x1f8] sm:$0xff] %v830
        %1008 = vst.msk [vmem:[%s268 + $0x200] sm:$0xff] %vm947, %v929
        %1009 = vst [vmem:[%s268 + $0x208] sm:$0xff] %v719
        %1010 = vst [vmem:[%s268 + $0x210] sm:$0xff] %v721
        %1011 = vst [vmem:[%s268 + $0x218] sm:$0xff] %v832
        %1012 = vst [vmem:[%s268 + $0x220] sm:$0xff] %v834
        %1013 = vst.msk [vmem:[%s268 + $0x228] sm:$0xff] %vm947, %v932
        %1014 = vst [vmem:[%s268 + $0x230] sm:$0xff] %v725
        %1015 = vst [vmem:[%s268 + $0x238] sm:$0xff] %v727
        %1016 = vst [vmem:[%s268 + $0x240] sm:$0xff] %v838
        %1017 = vst [vmem:[%s268 + $0x248] sm:$0xff] %v840
        %1018 = vst.msk [vmem:[%s268 + $0x250] sm:$0xff] %vm947, %v937
        %1019 = vst [vmem:[%s268 + $0x258] sm:$0xff] %v729
        %1020 = vst [vmem:[%s268 + $0x260] sm:$0xff] %v731
        %1021 = vst [vmem:[%s268 + $0x268] sm:$0xff] %v842
        %1022 = vst [vmem:[%s268 + $0x270] sm:$0xff] %v844
        %1023 = vst.msk [vmem:[%s268 + $0x278] sm:$0xff] %vm947, %v940
        %s1024 = smul.u32 16, %s18
        %p1025 = scmp.lt.s32.totalorder %s1024, 63
        %s1026 = scalar_select %p1025, %s1024, 63
        %s1027 = smul.addr %s1026, 5
        %s1028 = smul.addr %s1027, 8
        %s1029 = scalar_lea.vmem %s5, %s1028
        // Predicated region
        $region53: #{tpu_custom_call.1} parent=39 // pred_check
          %p1030 = pneg %p146
        $region54: #{tpu_custom_call.1} parent=39 // pred_check_branch
          %1032 = sbr.rel (%p1030) target = $region56
        $region55: #{tpu_custom_call.1} parent=39 // pred_region
          %s1033 = smul.u32 16, %s18
        $region56: #{tpu_custom_call.1} parent=39 // pred_fallthru
          _
      $region40: #{tpu_custom_call.1} parent=5 // pred_fallthru
        _
      %p1034 = scmp.le.s32.totalorder 2, %s13
      // Predicated region
      $region57: #{tpu_custom_call.1} parent=5 // pred_check
        %p1035 = pneg %p1034
      $region58: #{tpu_custom_call.1} parent=5 // pred_check_branch
        %1037 = sbr.rel (%p1035) target = $region60
      $region59: #{tpu_custom_call.1} parent=5 // pred_region
        %s1038 = ssub.s32 %s13, 2
        // Predicated region
        $region61: #{tpu_custom_call.1} parent=59 // pred_check
          %p1039 = pneg %p152
        $region62: #{tpu_custom_call.1} parent=59 // pred_check_branch
          %1041 = sbr.rel (%p1039) target = $region64
        $region63: #{tpu_custom_call.1} parent=59 // pred_region
          %s1042 = smul.u32 16, %s19
          %p1043 = scmp.lt.s32.totalorder %s1042, 63
          %s1044 = scalar_select %p1043, %s1042, 63
          %s1045 = smul.addr %s1044, 5
          %s1046 = smul.addr %s1045, 8
          %s1047 = scalar_lea.vmem %s5, %s1046
        $region64: #{tpu_custom_call.1} parent=59 // pred_fallthru
          _
      $region60: #{tpu_custom_call.1} parent=5 // pred_fallthru
        _
    $region6: #{tpu_custom_call.1} parent=1 // loop_footer
      %s17 = sadd.s32 1, %s13
    $region7: #{tpu_custom_call.1} parent=1 // loop_footer_branch
      %12 = sbr.rel target = $region3
    $region8: #{tpu_custom_call.1} parent=1 // loop_exit
      _
    %1048 = vsyncpa [#allocation3], 1
    %s1049 = scalar_lea.sflag [#allocation3], 1
    %1050 = vsyncpa %s1049, 1
    %1051 = vsyncpa [#allocation5], 1

</llo_original>
